<compile_context>
chip_gen: v5e
topology: v5e:2x2
jax: 0.10.0
libtpu: 0.0.40
codegen_flags: <defaults>
</compile_context>

<pallas_src>
import math

import jax
import jax.numpy as jnp
from jax.experimental import pallas as pl
from jax.experimental.pallas import tpu as pltpu


def _self_attention_kernel(h_ref, a_ref, b_ref, o_ref):
    # h_ref: (block_b, N, dim)   a_ref: (dim, da)   b_ref: (1, da)
    # o_ref: (block_b, dim)
    bb, n, dim = h_ref.shape
    da = a_ref.shape[1]

    h_nat = h_ref[...]                       # native dtype tile (f32 or bf16)
    a = a_ref[...]                           # same dtype as h (cast in wrapper)
    b_row = b_ref[...].astype(jnp.float32)   # (1, da)

    # --- h @ a on the MXU with M = block_b*N (leading-dim merge), f32 acc ----
    h2 = h_nat.reshape(bb * n, dim)
    t = jnp.tanh(jnp.dot(h2, a, preferred_element_type=jnp.float32))  # (bb*N, da)
    t3 = t.reshape(bb, n, da)                                         # (bb, N, da)

    # --- scores: VPU multiply + lane reduce (no width-1 MXU matmul) ----------
    e = jnp.sum(t3 * b_row, axis=-1)          # (bb, N) f32, N on the lane axis

    # --- exact softmax over N (lane axis), f32 -------------------------------
    e_max = jnp.max(e, axis=-1, keepdims=True)      # (bb, 1)
    p = jnp.exp(e - e_max)                          # (bb, N)
    denom = jnp.sum(p, axis=-1, keepdims=True)      # (bb, 1)
    attn = p / denom                                # exact divide (tiny op)

    # --- out = attention @ h as a weighted sublane reduction -----------------
    # multiply in h's native dtype (bf16 halves VALU work on v6e/v7x),
    # accumulate in f32.
    w = attn.astype(h_nat.dtype)                                    # (bb, N)
    out = jnp.sum(w[:, :, None] * h_nat, axis=1, dtype=jnp.float32)  # (bb, dim)
    o_ref[...] = out.astype(o_ref.dtype)


def _num_tensorcores():
    # v7x has 2 TensorCores per chip; v5e/v6e have 1.  Best-effort query; on
    # failure (interpret mode / CPU) fall back to 1 (no forced grid split).
    try:
        kind = (getattr(jax.devices()[0], "device_kind", "") or "").lower()
        if "v7" in kind or "7x" in kind:
            return 2
    except Exception:
        pass
    return 1


def self_attention_layer(h, a, b, *, block_b=None, num_cores=None):
    """h: (B, N, dim), a: (dim, da), b: (da, 1) -> (B, dim)."""
    B, N, dim = h.shape
    da = a.shape[1]
    assert a.shape == (dim, da) and b.shape == (da, 1)

    itemsize = jnp.dtype(h.dtype).itemsize
    if num_cores is None:
        num_cores = _num_tensorcores()

    # Batch block sized by bytes (~4 MiB of h per grid step), multiple of 8,
    # never larger than B rounded up to the sublane quantum.
    if block_b is None:
        bytes_per_batch = max(N * dim * itemsize, 1)
        block_b = max(8, (((4 << 20) // bytes_per_batch) // 8) * 8)
    block_b = max(8, (block_b // 8) * 8)
    b_round = ((B + 7) // 8) * 8
    block_b = min(block_b, b_round)

    # v7x megacore: nudge the grid-step count to be even so both TensorCores
    # get equal work.  Single-TC chips (v5e/v6e) keep the full-size block.
    if num_cores > 1:
        steps = pl.cdiv(B, block_b)
        if steps % 2 == 1 and b_round >= 16:
            cand = max(8, ((pl.cdiv(b_round, steps + 1) + 7) // 8) * 8)
            if pl.cdiv(B, cand) % 2 == 0:
                block_b = cand

    grid = (pl.cdiv(B, block_b),)

    a_k = a.astype(h.dtype)                       # bf16-native MXU path when h is bf16
    b_row = b.reshape(1, da).astype(jnp.float32)  # used on the f32 VPU score path

    return pl.pallas_call(
        _self_attention_kernel,
        out_shape=jax.ShapeDtypeStruct((B, dim), h.dtype),
        grid_spec=pltpu.PrefetchScalarGridSpec(
            num_scalar_prefetch=0,
            grid=grid,
            in_specs=[
                pl.BlockSpec((block_b, N, dim), lambda i: (i, 0, 0)),
                pl.BlockSpec((dim, da), lambda i: (0, 0)),
                pl.BlockSpec((1, da), lambda i: (0, 0)),
            ],
            out_specs=pl.BlockSpec((block_b, dim), lambda i: (i, 0)),
        ),
        compiler_params=pltpu.CompilerParams(
            dimension_semantics=("parallel",),
            vmem_limit_bytes=32 << 20,
        ),
    )(h, a_k, b_row)


def _xavier_normal(key, shape):
    fan_in, fan_out = shape[0], shape[1]
    std = math.sqrt(2.0 / (fan_in + fan_out))
    return std * jax.random.normal(key, shape, dtype=jnp.float32)


def reference(h, a, b):
    # pure-JAX reference of the PyTorch forward (f32)
    h = h.astype(jnp.float32)
    e = jnp.matmul(jnp.tanh(jnp.matmul(h, a)), b)          # (B, N, 1)
    e = jnp.swapaxes(e, -1, -2)                            # (B, 1, N)
    attn = jax.nn.softmax(e, axis=-1)                      # (B, 1, N)
    return jnp.squeeze(jnp.matmul(attn, h), axis=-2)       # (B, dim)


if __name__ == "__main__":
    B, N, dim, da = 16, 8, 32, 16

    key = jax.random.PRNGKey(0)
    k_h, k_a, k_b = jax.random.split(key, 3)

    h = jax.random.normal(k_h, (B, N, dim), dtype=jnp.float32)
    a = _xavier_normal(k_a, (dim, da))
    b = _xavier_normal(k_b, (da, 1))

    ref = reference(h, a, b)

    # f32 path (exact softmax -> tight match)
    out = jax.block_until_ready(self_attention_layer(h, a, b))
    assert out.shape == (B, dim)
    assert jnp.allclose(out, ref, atol=1e-3, rtol=1e-3), "f32 mismatch vs reference"

    # ragged batch: exercises the no-pad partial last block
    Br = 13
    h_r = h[:Br]
    ref_r = reference(h_r, a, b)
    out_r = jax.block_until_ready(self_attention_layer(h_r, a, b))
    assert out_r.shape == (Br, dim)
    assert jnp.allclose(out_r, ref_r, atol=1e-3, rtol=1e-3), "ragged-B mismatch"

    # bf16 HBM-transfer path (bandwidth lever); f32 accumulation in-kernel.
    out_bf16 = jax.block_until_ready(
        self_attention_layer(h.astype(jnp.bfloat16), a, b))
    assert out_bf16.shape == (B, dim)
    assert bool(jnp.all(jnp.isfinite(out_bf16.astype(jnp.float32))))
    assert jnp.allclose(out_bf16.astype(jnp.float32), ref, atol=1e-1, rtol=1e-1), \
        "bf16 path too far from reference"

    print("KERNEL_OK")
</pallas_src>

<mosaic_0001>
module attributes {stable_mosaic.version = 11 : i64} {
  func.func @_self_attention_kernel(%arg0: i32, %arg1: memref<16x8x32xf32, #tpu.memory_space<vmem>>, %arg2: memref<32x16xf32, #tpu.memory_space<vmem>>, %arg3: memref<1x16xf32, #tpu.memory_space<vmem>>, %arg4: memref<16x32xf32, #tpu.memory_space<vmem>>) attributes {dimension_semantics = [#tpu.dimension_semantics<parallel>], iteration_bounds = array<i64: 1>, scalar_prefetch = 0 : i64, scratch_operands = 0 : i64, tpu.core_type = #tpu.core_type<tc>, window_params = [{transform_indices = @transform_0, window_bounds = array<i64: 16, 8, 32>}, {pipeline_mode = #tpu.pipeline_mode<synchronous>, transform_indices = @transform_1, window_bounds = array<i64: 32, 16>}, {pipeline_mode = #tpu.pipeline_mode<synchronous>, transform_indices = @transform_2, window_bounds = array<i64: 1, 16>}, {transform_indices = @transform_3, window_bounds = array<i64: 16, 32>}]} {
    %c0 = arith.constant 0 : index
    %c0_0 = arith.constant 0 : index
    %c0_1 = arith.constant 0 : index
    %0 = vector.load %arg1[%c0, %c0_0, %c0_1] : memref<16x8x32xf32, #tpu.memory_space<vmem>>, vector<16x8x32xf32>
    %c0_2 = arith.constant 0 : index
    %c0_3 = arith.constant 0 : index
    %1 = vector.load %arg2[%c0_2, %c0_3] : memref<32x16xf32, #tpu.memory_space<vmem>>, vector<32x16xf32>
    %c0_4 = arith.constant 0 : index
    %c0_5 = arith.constant 0 : index
    %2 = vector.load %arg3[%c0_4, %c0_5] : memref<1x16xf32, #tpu.memory_space<vmem>>, vector<1x16xf32>
    %3 = vector.shape_cast %0 : vector<16x8x32xf32> to vector<128x32xf32>
    %cst = arith.constant dense<0.000000e+00> : vector<128x16xf32>
    %4 = tpu.matmul %3, %1, %cst {dimension_numbers = #tpu.dot_dimension_numbers<[1], [0], [0], [1], [0, 0, 1, 1], [], []>} : vector<128x32xf32>, vector<32x16xf32>, vector<128x16xf32> -> vector<128x16xf32>
    %5 = math.tanh %4 : vector<128x16xf32>
    %6 = vector.shape_cast %5 : vector<128x16xf32> to vector<16x8x16xf32>
    %7 = vector.shape_cast %2 : vector<1x16xf32> to vector<1x1x16xf32>
    %8 = vector.broadcast %7 : vector<1x1x16xf32> to vector<16x8x16xf32>
    %9 = arith.mulf %6, %8 : vector<16x8x16xf32>
    %cst_6 = arith.constant dense<0.000000e+00> : vector<16x8xf32>
    %10 = vector.multi_reduction <add>, %9, %cst_6 [2] : vector<16x8x16xf32> to vector<16x8xf32>
    %cst_7 = arith.constant dense<0xFF800000> : vector<16xf32>
    %11 = vector.multi_reduction <maximumf>, %10, %cst_7 [1] : vector<16x8xf32> to vector<16xf32>
    %12 = vector.shape_cast %11 : vector<16xf32> to vector<16x1xf32>
    %13 = vector.broadcast %12 : vector<16x1xf32> to vector<16x8xf32>
    %14 = arith.subf %10, %13 : vector<16x8xf32>
    %15 = math.exp %14 : vector<16x8xf32>
    %cst_8 = arith.constant dense<0.000000e+00> : vector<16xf32>
    %16 = vector.multi_reduction <add>, %15, %cst_8 [1] : vector<16x8xf32> to vector<16xf32>
    %17 = vector.shape_cast %16 : vector<16xf32> to vector<16x1xf32>
    %18 = vector.broadcast %17 : vector<16x1xf32> to vector<16x8xf32>
    %19 = arith.divf %15, %18 : vector<16x8xf32>
    %20 = vector.shape_cast %19 : vector<16x8xf32> to vector<16x8x1xf32>
    %21 = vector.broadcast %20 : vector<16x8x1xf32> to vector<16x8x32xf32>
    %22 = arith.mulf %21, %0 : vector<16x8x32xf32>
    %cst_9 = arith.constant dense<0.000000e+00> : vector<16x32xf32>
    %23 = vector.multi_reduction <add>, %22, %cst_9 [1] : vector<16x8x32xf32> to vector<16x32xf32>
    %c0_10 = arith.constant 0 : index
    %c0_11 = arith.constant 0 : index
    %24 = vector.load %arg4[%c0_10, %c0_11] : memref<16x32xf32, #tpu.memory_space<vmem>>, vector<16x32xf32>
    tpu.vector_store %arg4[%c0_10, %c0_11], %23 {strides = array<i32>} : memref<16x32xf32, #tpu.memory_space<vmem>>, vector<16x32xf32>,
    return
  }
  func.func @transform_0(%arg0: i32) -> (i32, i32, i32) {
    %c0_i32 = arith.constant 0 : i32
    %c0_i32_0 = arith.constant 0 : i32
    %c0_i32_1 = arith.constant 0 : i32
    return %arg0, %c0_i32, %c0_i32_0 : i32, i32, i32
  }
  func.func @transform_1(%arg0: i32) -> (i32, i32) {
    %c0_i32 = arith.constant 0 : i32
    %c0_i32_0 = arith.constant 0 : i32
    %c0_i32_1 = arith.constant 0 : i32
    return %c0_i32, %c0_i32_0 : i32, i32
  }
  func.func @transform_2(%arg0: i32) -> (i32, i32) {
    %c0_i32 = arith.constant 0 : i32
    %c0_i32_0 = arith.constant 0 : i32
    %c0_i32_1 = arith.constant 0 : i32
    return %c0_i32, %c0_i32_0 : i32, i32
  }
  func.func @transform_3(%arg0: i32) -> (i32, i32) {
    %c0_i32 = arith.constant 0 : i32
    %c0_i32_0 = arith.constant 0 : i32
    return %arg0, %c0_i32 : i32, i32
  }
}

</mosaic_0001>

<llo_original>
// kernel: tpu_custom_call.1
$region0: #{tpu_custom_call.1}
  #allocation0 [shape = 'u32[]', space=smem, size = 0x4, offset = 0x4, fixed_abs, tag = 'smem constant byte address 0x4 - core index']
  #allocation1 [shape = 'u32[72,128]{1,0:T(1,128)}', space=vmem, size = 0x9000, scoped, tag = 'internal scratch']
  %s0 = inlined_call_operand.hbm [shape: f32[16,8,32], index: 0, kind: input, shape index: {}]
  %s1 = inlined_call_operand.vmem [shape: f32[32,16], index: 1, kind: input, shape index: {}]
  %s2 = inlined_call_operand.vmem [shape: f32[1,16], index: 2, kind: input, shape index: {}]
  %s3 = inlined_call_operand.hbm [shape: f32[16,32], index: 3, kind: output, shape index: {}]
  %s4 = sld [smem:[#allocation0]]
  $region26: #{tpu_custom_call.1} parent=0
    _
  %s6 = ssub.s32 1, %s4
  %s7 = scalar_select 0, %s6, %s4
  $region1: #{tpu_custom_call.1} parent=0
    #allocation2 [shape = 'u8[65536]{0}', space=vmem, size = 0x10000, scoped, tag = 'input window, operand 0, single buffered']
    #allocation3 [shape = 's32[1]{0}', space=sflag, size = 0x4, scoped, tag = 'scoped memory for tpu_custom_call.1']
    #allocation4 [shape = 's32[1]{0}', space=sflag, size = 0x4, scoped, tag = 'scoped memory for tpu_custom_call.1']
    #allocation5 [shape = 'u8[8192]{0}', space=vmem, size = 0x2000, scoped, tag = 'output window, operand 0, single buffered']
    %8 = vsyncpa [#allocation3], 0
    %9 = vsyncpa [#allocation4], 0
    // Predicated region
    $region2: #{tpu_custom_call.1} parent=1 // pred_check
      _
    $region3: #{tpu_custom_call.1} parent=1 // pred_check_branch
      %11 = sbr.rel (0) target = $region5
    $region4: #{tpu_custom_call.1} parent=1 // pred_region
      %13 = vsyncadd [#allocation3], 0
      %s14 = sshll.u32 %s0, 4
      %s15 = int_to_ptr.hbm [resolvable:$true] %s14
      %s16 = sshll.u32 [#allocation2], 4
      %s17 = int_to_ptr.vmem [resolvable:$true] %s16
      %22 = dma.hbm_to_vmem [thread:$0]  %s15, 2048, %s17, [#allocation3], 128, 128, 8
    $region5: #{tpu_custom_call.1} parent=1 // pred_fallthru
      _
    // Predicated region
    $region6: #{tpu_custom_call.1} parent=1 // pred_check
      _
    $region7: #{tpu_custom_call.1} parent=1 // pred_check_branch
      %24 = sbr.rel (0) target = $region9
    $region8: #{tpu_custom_call.1} parent=1 // pred_region
      _
    $region9: #{tpu_custom_call.1} parent=1 // pred_fallthru
      _
    // Predicated region
    $region10: #{tpu_custom_call.1} parent=1 // pred_check
      _
    $region11: #{tpu_custom_call.1} parent=1 // pred_check_branch
      %26 = sbr.rel (0) target = $region13
    $region12: #{tpu_custom_call.1} parent=1 // pred_region
      _
    $region13: #{tpu_custom_call.1} parent=1 // pred_fallthru
      _
    // Predicated region
    $region14: #{tpu_custom_call.1} parent=1 // pred_check
      _
    $region15: #{tpu_custom_call.1} parent=1 // pred_check_branch
      %28 = sbr.rel (0) target = $region17
    $region16: #{tpu_custom_call.1} parent=1 // pred_region
      %30 = dma.done [#allocation3], 2048
    $region17: #{tpu_custom_call.1} parent=1 // pred_fallthru
      _
    %v31 = vld [vmem:[#allocation2] sm:$0xff]
    %v32 = vld [vmem:[#allocation2 + $0x8] sm:$0xff]
    %v33 = vld [vmem:[#allocation2 + $0x10] sm:$0xff]
    %v34 = vld [vmem:[#allocation2 + $0x18] sm:$0xff]
    %v35 = vld [vmem:[#allocation2 + $0x20] sm:$0xff]
    %v36 = vld [vmem:[#allocation2 + $0x28] sm:$0xff]
    %v37 = vld [vmem:[#allocation2 + $0x30] sm:$0xff]
    %v38 = vld [vmem:[#allocation2 + $0x38] sm:$0xff]
    %v39 = vld [vmem:[#allocation2 + $0x40] sm:$0xff]
    %v40 = vld [vmem:[#allocation2 + $0x48] sm:$0xff]
    %v41 = vld [vmem:[#allocation2 + $0x50] sm:$0xff]
    %v42 = vld [vmem:[#allocation2 + $0x58] sm:$0xff]
    %v43 = vld [vmem:[#allocation2 + $0x60] sm:$0xff]
    %v44 = vld [vmem:[#allocation2 + $0x68] sm:$0xff]
    %v45 = vld [vmem:[#allocation2 + $0x70] sm:$0xff]
    %v46 = vld [vmem:[#allocation2 + $0x78] sm:$0xff]
    %v47 = vld [vmem:[%s1] sm:$0xff]
    %v48 = vld [vmem:[%s1 + $0x8] sm:$0xff]
    %v49 = vld [vmem:[%s1 + $0x10] sm:$0xff]
    %v50 = vld [vmem:[%s1 + $0x18] sm:$0xff]
    %v51 = vld [vmem:[%s2] sm:$0x1]
    %vm52 = vcmask 261120
    %v54 = vsel %vm52, %v31, 0
    %v57 = vsel %vm52, %v32, 0
    %v60 = vsel %vm52, %v33, 0
    %v63 = vsel %vm52, %v34, 0
    %v66 = vsel %vm52, %v35, 0
    %v69 = vsel %vm52, %v36, 0
    %v72 = vsel %vm52, %v37, 0
    %v75 = vsel %vm52, %v38, 0
    %v78 = vsel %vm52, %v39, 0
    %v81 = vsel %vm52, %v40, 0
    %v84 = vsel %vm52, %v41, 0
    %v87 = vsel %vm52, %v42, 0
    %v90 = vsel %vm52, %v43, 0
    %v93 = vsel %vm52, %v44, 0
    %v96 = vsel %vm52, %v45, 0
    %v99 = vsel %vm52, %v46, 0
    %101 = vmatpush.msra.mxu0 0.0
    %102 = vmatpush.msra.mxu0 0.0
    %103 = vmatpush.msra.mxu0 0.0
    %104 = vmatpush.msra.mxu0 0.0
    %105 = vmatpush.msra.mxu0 0.0
    %106 = vmatpush.msra.mxu0 0.0
    %107 = vmatpush.msra.mxu0 0.0
    %108 = vmatpush.msra.mxu0 0.0
    %109 = vmatpush.msra.mxu0 0.0
    %110 = vmatpush.msra.mxu0 0.0
    %111 = vmatpush.msra.mxu0 0.0
    %112 = vmatpush.msra.mxu0 0.0
    %113 = vmatpush.msra.mxu0 %v50
    %114 = vmatpush.msra.mxu0 %v49
    %115 = vmatpush.msra.mxu0 %v48
    %116 = vmatpush.msra.mxu0 %v47
    %117 = vmatmul.f32.gmra.mxu0 %v54
    %v118 = vpop.f32.mrf.mxu0
    %v119 = vadd.f32 0.0, %v118
    %120 = vmatmul.f32.gmra.mxu0 %v57
    %v121 = vpop.f32.mrf.mxu0
    %v122 = vadd.f32 0.0, %v121
    %123 = vmatmul.f32.gmra.mxu0 %v60
    %v124 = vpop.f32.mrf.mxu0
    %v125 = vadd.f32 0.0, %v124
    %126 = vmatmul.f32.gmra.mxu0 %v63
    %v127 = vpop.f32.mrf.mxu0
    %v128 = vadd.f32 0.0, %v127
    %129 = vmatmul.f32.gmra.mxu0 %v66
    %v130 = vpop.f32.mrf.mxu0
    %v131 = vadd.f32 0.0, %v130
    %132 = vmatmul.f32.gmra.mxu0 %v69
    %v133 = vpop.f32.mrf.mxu0
    %v134 = vadd.f32 0.0, %v133
    %135 = vmatmul.f32.gmra.mxu0 %v72
    %v136 = vpop.f32.mrf.mxu0
    %v137 = vadd.f32 0.0, %v136
    %138 = vmatmul.f32.gmra.mxu0 %v75
    %v139 = vpop.f32.mrf.mxu0
    %v140 = vadd.f32 0.0, %v139
    %141 = vmatmul.f32.gmra.mxu0 %v78
    %v142 = vpop.f32.mrf.mxu0
    %v143 = vadd.f32 0.0, %v142
    %144 = vmatmul.f32.gmra.mxu0 %v81
    %v145 = vpop.f32.mrf.mxu0
    %v146 = vadd.f32 0.0, %v145
    %147 = vmatmul.f32.gmra.mxu0 %v84
    %v148 = vpop.f32.mrf.mxu0
    %v149 = vadd.f32 0.0, %v148
    %150 = vmatmul.f32.gmra.mxu0 %v87
    %v151 = vpop.f32.mrf.mxu0
    %v152 = vadd.f32 0.0, %v151
    %153 = vmatmul.f32.gmra.mxu0 %v90
    %v154 = vpop.f32.mrf.mxu0
    %v155 = vadd.f32 0.0, %v154
    %156 = vmatmul.f32.gmra.mxu0 %v93
    %v157 = vpop.f32.mrf.mxu0
    %v158 = vadd.f32 0.0, %v157
    %159 = vmatmul.f32.gmra.mxu0 %v96
    %v160 = vpop.f32.mrf.mxu0
    %v161 = vadd.f32 0.0, %v160
    %162 = vmatmul.f32.gmra.mxu0 %v99
    %v163 = vpop.f32.mrf.mxu0
    %v164 = vadd.f32 0.0, %v163
    %165 = vdwg.mxu0
    %v166 = vtanh.pop %v119
    %v167 = vtanh.pop %v122
    %v168 = vtanh.pop %v125
    %v169 = vtanh.pop %v128
    %v170 = vtanh.pop %v131
    %v171 = vtanh.pop %v134
    %v172 = vtanh.pop %v137
    %v173 = vtanh.pop %v140
    %v174 = vtanh.pop %v143
    %v175 = vtanh.pop %v146
    %v176 = vtanh.pop %v149
    %v177 = vtanh.pop %v152
    %v178 = vtanh.pop %v155
    %v179 = vtanh.pop %v158
    %v180 = vtanh.pop %v161
    %v181 = vtanh.pop %v164
    %v183 = vperm.slane %v51, 0
    %v185 = vmul.f32 %v166, %v183
    %v186 = vmul.f32 %v167, %v183
    %v187 = vmul.f32 %v168, %v183
    %v188 = vmul.f32 %v169, %v183
    %v189 = vmul.f32 %v170, %v183
    %v190 = vmul.f32 %v171, %v183
    %v191 = vmul.f32 %v172, %v183
    %v192 = vmul.f32 %v173, %v183
    %v193 = vmul.f32 %v174, %v183
    %v194 = vmul.f32 %v175, %v183
    %v195 = vmul.f32 %v176, %v183
    %v196 = vmul.f32 %v177, %v183
    %v197 = vmul.f32 %v178, %v183
    %v198 = vmul.f32 %v179, %v183
    %v199 = vmul.f32 %v180, %v183
    %v200 = vmul.f32 %v181, %v183
    %vm201 = vcmask 130048
    %v202 = vsel %vm201, %v185, 0.0
    %203 = vadd.xlane.f32.xlu0 %v202
    %v204 = vpop.xlane.xlu0 %203
    %v205 = vsel %vm201, %v186, 0.0
    %206 = vadd.xlane.f32.xlu0 %v205
    %v207 = vpop.xlane.xlu0 %206
    %v208 = vsel %vm201, %v187, 0.0
    %209 = vadd.xlane.f32.xlu0 %v208
    %v210 = vpop.xlane.xlu0 %209
    %v211 = vsel %vm201, %v188, 0.0
    %212 = vadd.xlane.f32.xlu0 %v211
    %v213 = vpop.xlane.xlu0 %212
    %v214 = vsel %vm201, %v189, 0.0
    %215 = vadd.xlane.f32.xlu0 %v214
    %v216 = vpop.xlane.xlu0 %215
    %v217 = vsel %vm201, %v190, 0.0
    %218 = vadd.xlane.f32.xlu0 %v217
    %v219 = vpop.xlane.xlu0 %218
    %v220 = vsel %vm201, %v191, 0.0
    %221 = vadd.xlane.f32.xlu0 %v220
    %v222 = vpop.xlane.xlu0 %221
    %v223 = vsel %vm201, %v192, 0.0
    %224 = vadd.xlane.f32.xlu0 %v223
    %v225 = vpop.xlane.xlu0 %224
    %v226 = vsel %vm201, %v193, 0.0
    %227 = vadd.xlane.f32.xlu0 %v226
    %v228 = vpop.xlane.xlu0 %227
    %v229 = vsel %vm201, %v194, 0.0
    %230 = vadd.xlane.f32.xlu0 %v229
    %v231 = vpop.xlane.xlu0 %230
    %v232 = vsel %vm201, %v195, 0.0
    %233 = vadd.xlane.f32.xlu0 %v232
    %v234 = vpop.xlane.xlu0 %233
    %v235 = vsel %vm201, %v196, 0.0
    %236 = vadd.xlane.f32.xlu0 %v235
    %v237 = vpop.xlane.xlu0 %236
    %v238 = vsel %vm201, %v197, 0.0
    %239 = vadd.xlane.f32.xlu0 %v238
    %v240 = vpop.xlane.xlu0 %239
    %v241 = vsel %vm201, %v198, 0.0
    %242 = vadd.xlane.f32.xlu0 %v241
    %v243 = vpop.xlane.xlu0 %242
    %v244 = vsel %vm201, %v199, 0.0
    %245 = vadd.xlane.f32.xlu0 %v244
    %v246 = vpop.xlane.xlu0 %245
    %v247 = vsel %vm201, %v200, 0.0
    %248 = vadd.xlane.f32.xlu0 %v247
    %v249 = vpop.xlane.xlu0 %248
    %v266 = vlaneseq
    %v267 = vand.u32 %v266, 127
    %v268 = vperm.slane %v204, %v267
    %v269 = vperm.slane %v207, %v267
    %v270 = vperm.slane %v210, %v267
    %v271 = vperm.slane %v213, %v267
    %v272 = vperm.slane %v216, %v267
    %v273 = vperm.slane %v219, %v267
    %v274 = vperm.slane %v222, %v267
    %v275 = vperm.slane %v225, %v267
    %v276 = vperm.slane %v228, %v267
    %v277 = vperm.slane %v231, %v267
    %v278 = vperm.slane %v234, %v267
    %v279 = vperm.slane %v237, %v267
    %v280 = vperm.slane %v240, %v267
    %v281 = vperm.slane %v243, %v267
    %v282 = vperm.slane %v246, %v267
    %v283 = vperm.slane %v249, %v267
    %vm284 = vcmask 1041409
    %v285 = vsel %vm284, %v269, %v268
    %vm286 = vcmask 1042434
    %v287 = vsel %vm286, %v270, %v285
    %vm288 = vcmask 1043459
    %v289 = vsel %vm288, %v271, %v287
    %vm290 = vcmask 1044484
    %v291 = vsel %vm290, %v272, %v289
    %vm292 = vcmask 1045509
    %v293 = vsel %vm292, %v273, %v291
    %vm294 = vcmask 1046534
    %v295 = vsel %vm294, %v274, %v293
    %vm296 = vcmask 1047559
    %v297 = vsel %vm296, %v275, %v295
    %v298 = vsel %vm284, %v277, %v276
    %v299 = vsel %vm286, %v278, %v298
    %v300 = vsel %vm288, %v279, %v299
    %v301 = vsel %vm290, %v280, %v300
    %v302 = vsel %vm292, %v281, %v301
    %v303 = vsel %vm294, %v282, %v302
    %v304 = vsel %vm296, %v283, %v303
    %vm307 = vcmask 64512
    %v308 = vsel %vm307, %v297, -inf
    %309 = vmax.xlane.f32.xlu0 %v308
    %v310 = vpop.xlane.xlu0 %309
    %v311 = vsel %vm307, %v304, -inf
    %312 = vmax.xlane.f32.xlu0 %v311
    %v313 = vpop.xlane.xlu0 %312
    %v316 = vperm.slane %v310, 0
    %v317 = vperm.slane %v310, 1
    %v318 = vperm.slane %v310, 2
    %v319 = vperm.slane %v310, 3
    %v320 = vperm.slane %v310, 4
    %v321 = vperm.slane %v310, 5
    %v322 = vperm.slane %v310, 6
    %v323 = vperm.slane %v310, 7
    %v324 = vperm.slane %v313, 0
    %v325 = vperm.slane %v313, 1
    %v326 = vperm.slane %v313, 2
    %v327 = vperm.slane %v313, 3
    %v328 = vperm.slane %v313, 4
    %v329 = vperm.slane %v313, 5
    %v330 = vperm.slane %v313, 6
    %v331 = vperm.slane %v313, 7
    %v348 = vsub.f32 %v204, %v316
    %v349 = vsub.f32 %v207, %v317
    %v350 = vsub.f32 %v210, %v318
    %v351 = vsub.f32 %v213, %v319
    %v352 = vsub.f32 %v216, %v320
    %v353 = vsub.f32 %v219, %v321
    %v354 = vsub.f32 %v222, %v322
    %v355 = vsub.f32 %v225, %v323
    %v356 = vsub.f32 %v228, %v324
    %v357 = vsub.f32 %v231, %v325
    %v358 = vsub.f32 %v234, %v326
    %v359 = vsub.f32 %v237, %v327
    %v360 = vsub.f32 %v240, %v328
    %v361 = vsub.f32 %v243, %v329
    %v362 = vsub.f32 %v246, %v330
    %v363 = vsub.f32 %v249, %v331
    %v364 = vmul.f32 %v348, 1.442695
    %v365 = vpow.pop %v364
    %v366 = vmul.f32 %v349, 1.442695
    %v367 = vpow.pop %v366
    %v368 = vmul.f32 %v350, 1.442695
    %v369 = vpow.pop %v368
    %v370 = vmul.f32 %v351, 1.442695
    %v371 = vpow.pop %v370
    %v372 = vmul.f32 %v352, 1.442695
    %v373 = vpow.pop %v372
    %v374 = vmul.f32 %v353, 1.442695
    %v375 = vpow.pop %v374
    %v376 = vmul.f32 %v354, 1.442695
    %v377 = vpow.pop %v376
    %v378 = vmul.f32 %v355, 1.442695
    %v379 = vpow.pop %v378
    %v380 = vmul.f32 %v356, 1.442695
    %v381 = vpow.pop %v380
    %v382 = vmul.f32 %v357, 1.442695
    %v383 = vpow.pop %v382
    %v384 = vmul.f32 %v358, 1.442695
    %v385 = vpow.pop %v384
    %v386 = vmul.f32 %v359, 1.442695
    %v387 = vpow.pop %v386
    %v388 = vmul.f32 %v360, 1.442695
    %v389 = vpow.pop %v388
    %v390 = vmul.f32 %v361, 1.442695
    %v391 = vpow.pop %v390
    %v392 = vmul.f32 %v362, 1.442695
    %v393 = vpow.pop %v392
    %v394 = vmul.f32 %v363, 1.442695
    %v395 = vpow.pop %v394
    %412 = vset.pattern.permute.xlu0 0
    %413 = vperm.xlu0 %412, %v365
    %v414 = vpop.permute.xlu0 %413
    %415 = vset.pattern.permute.xlu0 0
    %416 = vperm.xlu0 %415, %v367
    %v417 = vpop.permute.xlu0 %416
    %418 = vset.pattern.permute.xlu0 0
    %419 = vperm.xlu0 %418, %v369
    %v420 = vpop.permute.xlu0 %419
    %421 = vset.pattern.permute.xlu0 0
    %422 = vperm.xlu0 %421, %v371
    %v423 = vpop.permute.xlu0 %422
    %424 = vset.pattern.permute.xlu0 0
    %425 = vperm.xlu0 %424, %v373
    %v426 = vpop.permute.xlu0 %425
    %427 = vset.pattern.permute.xlu0 0
    %428 = vperm.xlu0 %427, %v375
    %v429 = vpop.permute.xlu0 %428
    %430 = vset.pattern.permute.xlu0 0
    %431 = vperm.xlu0 %430, %v377
    %v432 = vpop.permute.xlu0 %431
    %433 = vset.pattern.permute.xlu0 0
    %434 = vperm.xlu0 %433, %v379
    %v435 = vpop.permute.xlu0 %434
    %436 = vset.pattern.permute.xlu0 0
    %437 = vperm.xlu0 %436, %v381
    %v438 = vpop.permute.xlu0 %437
    %439 = vset.pattern.permute.xlu0 0
    %440 = vperm.xlu0 %439, %v383
    %v441 = vpop.permute.xlu0 %440
    %442 = vset.pattern.permute.xlu0 0
    %443 = vperm.xlu0 %442, %v385
    %v444 = vpop.permute.xlu0 %443
    %445 = vset.pattern.permute.xlu0 0
    %446 = vperm.xlu0 %445, %v387
    %v447 = vpop.permute.xlu0 %446
    %448 = vset.pattern.permute.xlu0 0
    %449 = vperm.xlu0 %448, %v389
    %v450 = vpop.permute.xlu0 %449
    %451 = vset.pattern.permute.xlu0 0
    %452 = vperm.xlu0 %451, %v391
    %v453 = vpop.permute.xlu0 %452
    %454 = vset.pattern.permute.xlu0 0
    %455 = vperm.xlu0 %454, %v393
    %v456 = vpop.permute.xlu0 %455
    %457 = vset.pattern.permute.xlu0 0
    %458 = vperm.xlu0 %457, %v395
    %v459 = vpop.permute.xlu0 %458
    %v460 = vperm.slane %v414, %v267
    %v461 = vperm.slane %v417, %v267
    %v462 = vperm.slane %v420, %v267
    %v463 = vperm.slane %v423, %v267
    %v464 = vperm.slane %v426, %v267
    %v465 = vperm.slane %v429, %v267
    %v466 = vperm.slane %v432, %v267
    %v467 = vperm.slane %v435, %v267
    %v468 = vperm.slane %v438, %v267
    %v469 = vperm.slane %v441, %v267
    %v470 = vperm.slane %v444, %v267
    %v471 = vperm.slane %v447, %v267
    %v472 = vperm.slane %v450, %v267
    %v473 = vperm.slane %v453, %v267
    %v474 = vperm.slane %v456, %v267
    %v475 = vperm.slane %v459, %v267
    %v476 = vsel %vm284, %v461, %v460
    %v477 = vsel %vm286, %v462, %v476
    %v478 = vsel %vm288, %v463, %v477
    %v479 = vsel %vm290, %v464, %v478
    %v480 = vsel %vm292, %v465, %v479
    %v481 = vsel %vm294, %v466, %v480
    %v482 = vsel %vm296, %v467, %v481
    %v483 = vsel %vm284, %v469, %v468
    %v484 = vsel %vm286, %v470, %v483
    %v485 = vsel %vm288, %v471, %v484
    %v486 = vsel %vm290, %v472, %v485
    %v487 = vsel %vm292, %v473, %v486
    %v488 = vsel %vm294, %v474, %v487
    %v489 = vsel %vm296, %v475, %v488
    %v492 = vsel %vm307, %v482, 0.0
    %493 = vadd.xlane.f32.xlu0 %v492
    %v494 = vpop.xlane.xlu0 %493
    %v495 = vsel %vm307, %v489, 0.0
    %496 = vadd.xlane.f32.xlu0 %v495
    %v497 = vpop.xlane.xlu0 %496
    %v500 = vperm.slane %v494, 0
    %v501 = vperm.slane %v494, 1
    %v502 = vperm.slane %v494, 2
    %v503 = vperm.slane %v494, 3
    %v504 = vperm.slane %v494, 4
    %v505 = vperm.slane %v494, 5
    %v506 = vperm.slane %v494, 6
    %v507 = vperm.slane %v494, 7
    %v508 = vperm.slane %v497, 0
    %v509 = vperm.slane %v497, 1
    %v510 = vperm.slane %v497, 2
    %v511 = vperm.slane %v497, 3
    %v512 = vperm.slane %v497, 4
    %v513 = vperm.slane %v497, 5
    %v514 = vperm.slane %v497, 6
    %v515 = vperm.slane %v497, 7
    %v532 = vrcp.pop %v500
    %v533 = vmul.f32 %v500, %v532
    %v534 = vsub.f32 1.0, %v533
    %v535 = vmul.f32 %v532, %v534
    %v536 = vadd.f32 %v532, %v535
    %vm537 = vweird.f32 %v500
    %vm538 = vweird.f32 %v532
    %vm539 = vmor %vm537, %vm538
    %v540 = vsel %vm539, %v532, %v536
    %v541 = vand.u32 2147483647, %v500
    %vm542 = vcmp.eq.f32.partialorder %v541, 8.507059e+37
    %v543 = vand.u32 %v500, 2147483648
    %v544 = vor.u32 1.1754944e-38, %v543
    %v545 = vsel %vm542, %v544, %v540
    %v546 = vmul.f32 %v365, %v545
    %v547 = vrcp.pop %v501
    %v548 = vmul.f32 %v501, %v547
    %v549 = vsub.f32 1.0, %v548
    %v550 = vmul.f32 %v547, %v549
    %v551 = vadd.f32 %v547, %v550
    %vm552 = vweird.f32 %v501
    %vm553 = vweird.f32 %v547
    %vm554 = vmor %vm552, %vm553
    %v555 = vsel %vm554, %v547, %v551
    %v556 = vand.u32 2147483647, %v501
    %vm557 = vcmp.eq.f32.partialorder %v556, 8.507059e+37
    %v558 = vand.u32 %v501, 2147483648
    %v559 = vor.u32 1.1754944e-38, %v558
    %v560 = vsel %vm557, %v559, %v555
    %v561 = vmul.f32 %v367, %v560
    %v562 = vrcp.pop %v502
    %v563 = vmul.f32 %v502, %v562
    %v564 = vsub.f32 1.0, %v563
    %v565 = vmul.f32 %v562, %v564
    %v566 = vadd.f32 %v562, %v565
    %vm567 = vweird.f32 %v502
    %vm568 = vweird.f32 %v562
    %vm569 = vmor %vm567, %vm568
    %v570 = vsel %vm569, %v562, %v566
    %v571 = vand.u32 2147483647, %v502
    %vm572 = vcmp.eq.f32.partialorder %v571, 8.507059e+37
    %v573 = vand.u32 %v502, 2147483648
    %v574 = vor.u32 1.1754944e-38, %v573
    %v575 = vsel %vm572, %v574, %v570
    %v576 = vmul.f32 %v369, %v575
    %v577 = vrcp.pop %v503
    %v578 = vmul.f32 %v503, %v577
    %v579 = vsub.f32 1.0, %v578
    %v580 = vmul.f32 %v577, %v579
    %v581 = vadd.f32 %v577, %v580
    %vm582 = vweird.f32 %v503
    %vm583 = vweird.f32 %v577
    %vm584 = vmor %vm582, %vm583
    %v585 = vsel %vm584, %v577, %v581
    %v586 = vand.u32 2147483647, %v503
    %vm587 = vcmp.eq.f32.partialorder %v586, 8.507059e+37
    %v588 = vand.u32 %v503, 2147483648
    %v589 = vor.u32 1.1754944e-38, %v588
    %v590 = vsel %vm587, %v589, %v585
    %v591 = vmul.f32 %v371, %v590
    %v592 = vrcp.pop %v504
    %v593 = vmul.f32 %v504, %v592
    %v594 = vsub.f32 1.0, %v593
    %v595 = vmul.f32 %v592, %v594
    %v596 = vadd.f32 %v592, %v595
    %vm597 = vweird.f32 %v504
    %vm598 = vweird.f32 %v592
    %vm599 = vmor %vm597, %vm598
    %v600 = vsel %vm599, %v592, %v596
    %v601 = vand.u32 2147483647, %v504
    %vm602 = vcmp.eq.f32.partialorder %v601, 8.507059e+37
    %v603 = vand.u32 %v504, 2147483648
    %v604 = vor.u32 1.1754944e-38, %v603
    %v605 = vsel %vm602, %v604, %v600
    %v606 = vmul.f32 %v373, %v605
    %v607 = vrcp.pop %v505
    %v608 = vmul.f32 %v505, %v607
    %v609 = vsub.f32 1.0, %v608
    %v610 = vmul.f32 %v607, %v609
    %v611 = vadd.f32 %v607, %v610
    %vm612 = vweird.f32 %v505
    %vm613 = vweird.f32 %v607
    %vm614 = vmor %vm612, %vm613
    %v615 = vsel %vm614, %v607, %v611
    %v616 = vand.u32 2147483647, %v505
    %vm617 = vcmp.eq.f32.partialorder %v616, 8.507059e+37
    %v618 = vand.u32 %v505, 2147483648
    %v619 = vor.u32 1.1754944e-38, %v618
    %v620 = vsel %vm617, %v619, %v615
    %v621 = vmul.f32 %v375, %v620
    %v622 = vrcp.pop %v506
    %v623 = vmul.f32 %v506, %v622
    %v624 = vsub.f32 1.0, %v623
    %v625 = vmul.f32 %v622, %v624
    %v626 = vadd.f32 %v622, %v625
    %vm627 = vweird.f32 %v506
    %vm628 = vweird.f32 %v622
    %vm629 = vmor %vm627, %vm628
    %v630 = vsel %vm629, %v622, %v626
    %v631 = vand.u32 2147483647, %v506
    %vm632 = vcmp.eq.f32.partialorder %v631, 8.507059e+37
    %v633 = vand.u32 %v506, 2147483648
    %v634 = vor.u32 1.1754944e-38, %v633
    %v635 = vsel %vm632, %v634, %v630
    %v636 = vmul.f32 %v377, %v635
    %v637 = vrcp.pop %v507
    %v638 = vmul.f32 %v507, %v637
    %v639 = vsub.f32 1.0, %v638
    %v640 = vmul.f32 %v637, %v639
    %v641 = vadd.f32 %v637, %v640
    %vm642 = vweird.f32 %v507
    %vm643 = vweird.f32 %v637
    %vm644 = vmor %vm642, %vm643
    %v645 = vsel %vm644, %v637, %v641
    %v646 = vand.u32 2147483647, %v507
    %vm647 = vcmp.eq.f32.partialorder %v646, 8.507059e+37
    %v648 = vand.u32 %v507, 2147483648
    %v649 = vor.u32 1.1754944e-38, %v648
    %v650 = vsel %vm647, %v649, %v645
    %v651 = vmul.f32 %v379, %v650
    %v652 = vrcp.pop %v508
    %v653 = vmul.f32 %v508, %v652
    %v654 = vsub.f32 1.0, %v653
    %v655 = vmul.f32 %v652, %v654
    %v656 = vadd.f32 %v652, %v655
    %vm657 = vweird.f32 %v508
    %vm658 = vweird.f32 %v652
    %vm659 = vmor %vm657, %vm658
    %v660 = vsel %vm659, %v652, %v656
    %v661 = vand.u32 2147483647, %v508
    %vm662 = vcmp.eq.f32.partialorder %v661, 8.507059e+37
    %v663 = vand.u32 %v508, 2147483648
    %v664 = vor.u32 1.1754944e-38, %v663
    %v665 = vsel %vm662, %v664, %v660
    %v666 = vmul.f32 %v381, %v665
    %v667 = vrcp.pop %v509
    %v668 = vmul.f32 %v509, %v667
    %v669 = vsub.f32 1.0, %v668
    %v670 = vmul.f32 %v667, %v669
    %v671 = vadd.f32 %v667, %v670
    %vm672 = vweird.f32 %v509
    %vm673 = vweird.f32 %v667
    %vm674 = vmor %vm672, %vm673
    %v675 = vsel %vm674, %v667, %v671
    %v676 = vand.u32 2147483647, %v509
    %vm677 = vcmp.eq.f32.partialorder %v676, 8.507059e+37
    %v678 = vand.u32 %v509, 2147483648
    %v679 = vor.u32 1.1754944e-38, %v678
    %v680 = vsel %vm677, %v679, %v675
    %v681 = vmul.f32 %v383, %v680
    %v682 = vrcp.pop %v510
    %v683 = vmul.f32 %v510, %v682
    %v684 = vsub.f32 1.0, %v683
    %v685 = vmul.f32 %v682, %v684
    %v686 = vadd.f32 %v682, %v685
    %vm687 = vweird.f32 %v510
    %vm688 = vweird.f32 %v682
    %vm689 = vmor %vm687, %vm688
    %v690 = vsel %vm689, %v682, %v686
    %v691 = vand.u32 2147483647, %v510
    %vm692 = vcmp.eq.f32.partialorder %v691, 8.507059e+37
    %v693 = vand.u32 %v510, 2147483648
    %v694 = vor.u32 1.1754944e-38, %v693
    %v695 = vsel %vm692, %v694, %v690
    %v696 = vmul.f32 %v385, %v695
    %v697 = vrcp.pop %v511
    %v698 = vmul.f32 %v511, %v697
    %v699 = vsub.f32 1.0, %v698
    %v700 = vmul.f32 %v697, %v699
    %v701 = vadd.f32 %v697, %v700
    %vm702 = vweird.f32 %v511
    %vm703 = vweird.f32 %v697
    %vm704 = vmor %vm702, %vm703
    %v705 = vsel %vm704, %v697, %v701
    %v706 = vand.u32 2147483647, %v511
    %vm707 = vcmp.eq.f32.partialorder %v706, 8.507059e+37
    %v708 = vand.u32 %v511, 2147483648
    %v709 = vor.u32 1.1754944e-38, %v708
    %v710 = vsel %vm707, %v709, %v705
    %v711 = vmul.f32 %v387, %v710
    %v712 = vrcp.pop %v512
    %v713 = vmul.f32 %v512, %v712
    %v714 = vsub.f32 1.0, %v713
    %v715 = vmul.f32 %v712, %v714
    %v716 = vadd.f32 %v712, %v715
    %vm717 = vweird.f32 %v512
    %vm718 = vweird.f32 %v712
    %vm719 = vmor %vm717, %vm718
    %v720 = vsel %vm719, %v712, %v716
    %v721 = vand.u32 2147483647, %v512
    %vm722 = vcmp.eq.f32.partialorder %v721, 8.507059e+37
    %v723 = vand.u32 %v512, 2147483648
    %v724 = vor.u32 1.1754944e-38, %v723
    %v725 = vsel %vm722, %v724, %v720
    %v726 = vmul.f32 %v389, %v725
    %v727 = vrcp.pop %v513
    %v728 = vmul.f32 %v513, %v727
    %v729 = vsub.f32 1.0, %v728
    %v730 = vmul.f32 %v727, %v729
    %v731 = vadd.f32 %v727, %v730
    %vm732 = vweird.f32 %v513
    %vm733 = vweird.f32 %v727
    %vm734 = vmor %vm732, %vm733
    %v735 = vsel %vm734, %v727, %v731
    %v736 = vand.u32 2147483647, %v513
    %vm737 = vcmp.eq.f32.partialorder %v736, 8.507059e+37
    %v738 = vand.u32 %v513, 2147483648
    %v739 = vor.u32 1.1754944e-38, %v738
    %v740 = vsel %vm737, %v739, %v735
    %v741 = vmul.f32 %v391, %v740
    %v742 = vrcp.pop %v514
    %v743 = vmul.f32 %v514, %v742
    %v744 = vsub.f32 1.0, %v743
    %v745 = vmul.f32 %v742, %v744
    %v746 = vadd.f32 %v742, %v745
    %vm747 = vweird.f32 %v514
    %vm748 = vweird.f32 %v742
    %vm749 = vmor %vm747, %vm748
    %v750 = vsel %vm749, %v742, %v746
    %v751 = vand.u32 2147483647, %v514
    %vm752 = vcmp.eq.f32.partialorder %v751, 8.507059e+37
    %v753 = vand.u32 %v514, 2147483648
    %v754 = vor.u32 1.1754944e-38, %v753
    %v755 = vsel %vm752, %v754, %v750
    %v756 = vmul.f32 %v393, %v755
    %v757 = vrcp.pop %v515
    %v758 = vmul.f32 %v515, %v757
    %v759 = vsub.f32 1.0, %v758
    %v760 = vmul.f32 %v757, %v759
    %v761 = vadd.f32 %v757, %v760
    %vm762 = vweird.f32 %v515
    %vm763 = vweird.f32 %v757
    %vm764 = vmor %vm762, %vm763
    %v765 = vsel %vm764, %v757, %v761
    %v766 = vand.u32 2147483647, %v515
    %vm767 = vcmp.eq.f32.partialorder %v766, 8.507059e+37
    %v768 = vand.u32 %v515, 2147483648
    %v769 = vor.u32 1.1754944e-38, %v768
    %v770 = vsel %vm767, %v769, %v765
    %v771 = vmul.f32 %v395, %v770
    %773 = vset.pattern.permute.xlu0 0
    %774 = vperm.xlu0 %773, %v546
    %v775 = vpop.permute.xlu0 %774
    %778 = vset.pattern.permute.xlu0 0
    %779 = vperm.xlu0 %778, %v561
    %v780 = vpop.permute.xlu0 %779
    %783 = vset.pattern.permute.xlu0 0
    %784 = vperm.xlu0 %783, %v576
    %v785 = vpop.permute.xlu0 %784
    %788 = vset.pattern.permute.xlu0 0
    %789 = vperm.xlu0 %788, %v591
    %v790 = vpop.permute.xlu0 %789
    %793 = vset.pattern.permute.xlu0 0
    %794 = vperm.xlu0 %793, %v606
    %v795 = vpop.permute.xlu0 %794
    %798 = vset.pattern.permute.xlu0 0
    %799 = vperm.xlu0 %798, %v621
    %v800 = vpop.permute.xlu0 %799
    %803 = vset.pattern.permute.xlu0 0
    %804 = vperm.xlu0 %803, %v636
    %v805 = vpop.permute.xlu0 %804
    %808 = vset.pattern.permute.xlu0 0
    %809 = vperm.xlu0 %808, %v651
    %v810 = vpop.permute.xlu0 %809
    %813 = vset.pattern.permute.xlu0 0
    %814 = vperm.xlu0 %813, %v666
    %v815 = vpop.permute.xlu0 %814
    %818 = vset.pattern.permute.xlu0 0
    %819 = vperm.xlu0 %818, %v681
    %v820 = vpop.permute.xlu0 %819
    %823 = vset.pattern.permute.xlu0 0
    %824 = vperm.xlu0 %823, %v696
    %v825 = vpop.permute.xlu0 %824
    %828 = vset.pattern.permute.xlu0 0
    %829 = vperm.xlu0 %828, %v711
    %v830 = vpop.permute.xlu0 %829
    %833 = vset.pattern.permute.xlu0 0
    %834 = vperm.xlu0 %833, %v726
    %v835 = vpop.permute.xlu0 %834
    %838 = vset.pattern.permute.xlu0 0
    %839 = vperm.xlu0 %838, %v741
    %v840 = vpop.permute.xlu0 %839
    %843 = vset.pattern.permute.xlu0 0
    %844 = vperm.xlu0 %843, %v756
    %v845 = vpop.permute.xlu0 %844
    %848 = vset.pattern.permute.xlu0 0
    %849 = vperm.xlu0 %848, %v771
    %v850 = vpop.permute.xlu0 %849
    %v852 = vmul.f32 %v775, %v31
    %v853 = vmul.f32 %v780, %v32
    %v854 = vmul.f32 %v785, %v33
    %v855 = vmul.f32 %v790, %v34
    %v856 = vmul.f32 %v795, %v35
    %v857 = vmul.f32 %v800, %v36
    %v858 = vmul.f32 %v805, %v37
    %v859 = vmul.f32 %v810, %v38
    %v860 = vmul.f32 %v815, %v39
    %v861 = vmul.f32 %v820, %v40
    %v862 = vmul.f32 %v825, %v41
    %v863 = vmul.f32 %v830, %v42
    %v864 = vmul.f32 %v835, %v43
    %v865 = vmul.f32 %v840, %v44
    %v866 = vmul.f32 %v845, %v45
    %v867 = vmul.f32 %v850, %v46
    %v868 = vsel %vm52, %v852, 0.0
    %v869 = vrot.slane %v868, 4
    %v870 = vadd.f32 %v868, %v869
    %v871 = vrot.slane %v870, 2
    %v872 = vadd.f32 %v870, %v871
    %v873 = vrot.slane %v872, 1
    %v874 = vadd.f32 %v872, %v873
    %v875 = vsel %vm52, %v853, 0.0
    %v876 = vrot.slane %v875, 4
    %v877 = vadd.f32 %v875, %v876
    %v878 = vrot.slane %v877, 2
    %v879 = vadd.f32 %v877, %v878
    %v880 = vrot.slane %v879, 1
    %v881 = vadd.f32 %v879, %v880
    %v882 = vsel %vm52, %v854, 0.0
    %v883 = vrot.slane %v882, 4
    %v884 = vadd.f32 %v882, %v883
    %v885 = vrot.slane %v884, 2
    %v886 = vadd.f32 %v884, %v885
    %v887 = vrot.slane %v886, 1
    %v888 = vadd.f32 %v886, %v887
    %v889 = vsel %vm52, %v855, 0.0
    %v890 = vrot.slane %v889, 4
    %v891 = vadd.f32 %v889, %v890
    %v892 = vrot.slane %v891, 2
    %v893 = vadd.f32 %v891, %v892
    %v894 = vrot.slane %v893, 1
    %v895 = vadd.f32 %v893, %v894
    %v896 = vsel %vm52, %v856, 0.0
    %v897 = vrot.slane %v896, 4
    %v898 = vadd.f32 %v896, %v897
    %v899 = vrot.slane %v898, 2
    %v900 = vadd.f32 %v898, %v899
    %v901 = vrot.slane %v900, 1
    %v902 = vadd.f32 %v900, %v901
    %v903 = vsel %vm52, %v857, 0.0
    %v904 = vrot.slane %v903, 4
    %v905 = vadd.f32 %v903, %v904
    %v906 = vrot.slane %v905, 2
    %v907 = vadd.f32 %v905, %v906
    %v908 = vrot.slane %v907, 1
    %v909 = vadd.f32 %v907, %v908
    %v910 = vsel %vm52, %v858, 0.0
    %v911 = vrot.slane %v910, 4
    %v912 = vadd.f32 %v910, %v911
    %v913 = vrot.slane %v912, 2
    %v914 = vadd.f32 %v912, %v913
    %v915 = vrot.slane %v914, 1
    %v916 = vadd.f32 %v914, %v915
    %v917 = vsel %vm52, %v859, 0.0
    %v918 = vrot.slane %v917, 4
    %v919 = vadd.f32 %v917, %v918
    %v920 = vrot.slane %v919, 2
    %v921 = vadd.f32 %v919, %v920
    %v922 = vrot.slane %v921, 1
    %v923 = vadd.f32 %v921, %v922
    %v924 = vsel %vm52, %v860, 0.0
    %v925 = vrot.slane %v924, 4
    %v926 = vadd.f32 %v924, %v925
    %v927 = vrot.slane %v926, 2
    %v928 = vadd.f32 %v926, %v927
    %v929 = vrot.slane %v928, 1
    %v930 = vadd.f32 %v928, %v929
    %v931 = vsel %vm52, %v861, 0.0
    %v932 = vrot.slane %v931, 4
    %v933 = vadd.f32 %v931, %v932
    %v934 = vrot.slane %v933, 2
    %v935 = vadd.f32 %v933, %v934
    %v936 = vrot.slane %v935, 1
    %v937 = vadd.f32 %v935, %v936
    %v938 = vsel %vm52, %v862, 0.0
    %v939 = vrot.slane %v938, 4
    %v940 = vadd.f32 %v938, %v939
    %v941 = vrot.slane %v940, 2
    %v942 = vadd.f32 %v940, %v941
    %v943 = vrot.slane %v942, 1
    %v944 = vadd.f32 %v942, %v943
    %v945 = vsel %vm52, %v863, 0.0
    %v946 = vrot.slane %v945, 4
    %v947 = vadd.f32 %v945, %v946
    %v948 = vrot.slane %v947, 2
    %v949 = vadd.f32 %v947, %v948
    %v950 = vrot.slane %v949, 1
    %v951 = vadd.f32 %v949, %v950
    %v952 = vsel %vm52, %v864, 0.0
    %v953 = vrot.slane %v952, 4
    %v954 = vadd.f32 %v952, %v953
    %v955 = vrot.slane %v954, 2
    %v956 = vadd.f32 %v954, %v955
    %v957 = vrot.slane %v956, 1
    %v958 = vadd.f32 %v956, %v957
    %v959 = vsel %vm52, %v865, 0.0
    %v960 = vrot.slane %v959, 4
    %v961 = vadd.f32 %v959, %v960
    %v962 = vrot.slane %v961, 2
    %v963 = vadd.f32 %v961, %v962
    %v964 = vrot.slane %v963, 1
    %v965 = vadd.f32 %v963, %v964
    %v966 = vsel %vm52, %v866, 0.0
    %v967 = vrot.slane %v966, 4
    %v968 = vadd.f32 %v966, %v967
    %v969 = vrot.slane %v968, 2
    %v970 = vadd.f32 %v968, %v969
    %v971 = vrot.slane %v970, 1
    %v972 = vadd.f32 %v970, %v971
    %v973 = vsel %vm52, %v867, 0.0
    %v974 = vrot.slane %v973, 4
    %v975 = vadd.f32 %v973, %v974
    %v976 = vrot.slane %v975, 2
    %v977 = vadd.f32 %v975, %v976
    %v978 = vrot.slane %v977, 1
    %v979 = vadd.f32 %v977, %v978
    %v996 = vsel %vm284, %v881, %v874
    %v997 = vsel %vm286, %v888, %v996
    %v998 = vsel %vm288, %v895, %v997
    %v999 = vsel %vm290, %v902, %v998
    %v1000 = vsel %vm292, %v909, %v999
    %v1001 = vsel %vm294, %v916, %v1000
    %v1002 = vsel %vm296, %v923, %v1001
    %v1003 = vsel %vm284, %v937, %v930
    %v1004 = vsel %vm286, %v944, %v1003
    %v1005 = vsel %vm288, %v951, %v1004
    %v1006 = vsel %vm290, %v958, %v1005
    %v1007 = vsel %vm292, %v965, %v1006
    %v1008 = vsel %vm294, %v972, %v1007
    %v1009 = vsel %vm296, %v979, %v1008
    %1012 = vst.msk [vmem:[#allocation5] sm:$0xff] %vm52, %v1002
    %1013 = vst.msk [vmem:[#allocation5 + $0x8] sm:$0xff] %vm52, %v1009
    // Predicated region
    $region18: #{tpu_custom_call.1} parent=1 // pred_check
      _
    $region19: #{tpu_custom_call.1} parent=1 // pred_check_branch
      %1015 = sbr.rel (0) target = $region21
    $region20: #{tpu_custom_call.1} parent=1 // pred_region
      %1017 = vsyncadd [#allocation4], 0
      %s1018 = sshll.u32 [#allocation5], 4
      %s1019 = int_to_ptr.vmem [resolvable:$true] %s1018
      %s1020 = sshll.u32 %s3, 4
      %s1021 = int_to_ptr.hbm [resolvable:$true] %s1020
      %1026 = dma.vmem_to_hbm [thread:$0]  %s1019, 256, %s1021, [#allocation4], 128, 128, 8
    $region21: #{tpu_custom_call.1} parent=1 // pred_fallthru
      _
    // Predicated region
    $region22: #{tpu_custom_call.1} parent=1 // pred_check
      _
    $region23: #{tpu_custom_call.1} parent=1 // pred_check_branch
      %1028 = sbr.rel (0) target = $region25
    $region24: #{tpu_custom_call.1} parent=1 // pred_region
      %1030 = dma.done [#allocation4], 256
    $region25: #{tpu_custom_call.1} parent=1 // pred_fallthru
      _
    %1031 = vsyncpa [#allocation3], 1
    %1032 = vsyncpa [#allocation4], 1

</llo_original>
